<compile_context>
chip_gen: v5e
topology: v5e:2x2
jax: 0.10.0
libtpu: 0.0.40
codegen_flags: <defaults>
</compile_context>

<pallas_src>
import types

import numpy as np
import jax
import jax.numpy as jnp
from jax.experimental import pallas as pl
from jax.experimental.pallas import tpu as pltpu


# ---------------------------------------------------------------------------
# Pallas kernels
# ---------------------------------------------------------------------------

_TM = 128      # pair-row tile (second-to-last dim of every block; multiple of 8)
_EPS = 1e-8    # IoU denominator epsilon (zero-area padding boxes -> IoU 0, not NaN)


def _round_up(x, m):
    return ((int(x) + m - 1) // m) * m


def _pairwise_iou(b, t_t):
    """Pairwise IoU.  b: (TM, 4) xyxy boxes, t_t: (4, T_PAD) xyxy (transposed) -> (TM, T_PAD)."""
    bx1, by1, bx2, by2 = b[:, 0:1], b[:, 1:2], b[:, 2:3], b[:, 3:4]          # (TM, 1)
    tx1, ty1, tx2, ty2 = t_t[0:1, :], t_t[1:2, :], t_t[2:3, :], t_t[3:4, :]  # (1, T_PAD)
    area_b = (bx2 - bx1) * (by2 - by1)                                        # (TM, 1)
    area_t = (tx2 - tx1) * (ty2 - ty1)                                        # (1, T_PAD)
    iw = jnp.maximum(jnp.minimum(bx2, tx2) - jnp.maximum(bx1, tx1), 0.0)      # (TM, T_PAD)
    ih = jnp.maximum(jnp.minimum(by2, ty2) - jnp.maximum(by1, ty1), 0.0)
    inter = iw * ih
    return inter / (area_b + area_t - inter + _EPS)


def _associate_kernel(bh_ref, bo_ref, th_ref, to_ref, onehot_ref, out_ref):
    """GraphHead.associate_with_ground_truth for one (image, pair-tile).

    bh/bo:   (1, TM, 4)        f32  paired human/object boxes
    th/to:   (1, 4, T_PAD)     f32  GT human/object boxes (transposed, zero-padded)
    onehot:  (1, T_PAD, C_PAD) bf16 one-hot GT hoi labels (zero rows for padding)
    out:     (1, TM, C_PAD)    f32  binary interaction labels
    """
    iou_h = _pairwise_iou(bh_ref[0], th_ref[0])                      # (TM, T_PAD)
    iou_o = _pairwise_iou(bo_ref[0], to_ref[0])                      # (TM, T_PAD)
    match = (jnp.minimum(iou_h, iou_o) >= 0.5).astype(jnp.bfloat16)  # 0/1, bf16 lossless
    # labels[m, tgt_label[t]] = 1 for every matched (m, t)  <=>  (match @ onehot) > 0
    hits = jnp.dot(match, onehot_ref[0], preferred_element_type=jnp.float32)
    out_ref[0] = (hits > 0.0).astype(jnp.float32)


def _prior_kernel(onehot_cls_ref, sp_ref, mask_ref, out_ref):
    """GraphHead.compute_prior_scores for one (image, pair-tile).

    onehot_cls: (1, TM, K_PAD)     bf16 one-hot object class of the paired object
    sp:         (1, TM, 2)         f32  columns = [scores[x]**p, scores[y]**p] (host-gathered)
    mask:       (K_PAD, C_PAD)     bf16 object-class -> target-class binary mask
    out:        (1, 2, TM, C_PAD)  f32  prior scores (human, object)
    """
    mask_rows = jnp.dot(onehot_cls_ref[0], mask_ref[...],
                        preferred_element_type=jnp.float32)          # (TM, C_PAD) 0/1
    sp = sp_ref[0]                                                   # (TM, 2)
    out_ref[0, 0] = mask_rows * sp[:, 0:1]
    out_ref[0, 1] = mask_rows * sp[:, 1:2]


# ---------------------------------------------------------------------------
# pallas_call wrappers (batched over images, tiled over pair rows)
# ---------------------------------------------------------------------------

def _associate_batched(bh, bo, th_t, to_t, tgt_onehot):
    v, m_pad, _ = bh.shape
    t_pad = th_t.shape[2]
    c_pad = tgt_onehot.shape[2]
    grid = (v, m_pad // _TM)
    return pl.pallas_call(
        _associate_kernel,
        out_shape=jax.ShapeDtypeStruct((v, m_pad, c_pad), jnp.float32),
        grid=grid,
        in_specs=[
            pl.BlockSpec((1, _TM, 4), lambda b, i: (b, i, 0)),
            pl.BlockSpec((1, _TM, 4), lambda b, i: (b, i, 0)),
            pl.BlockSpec((1, 4, t_pad), lambda b, i: (b, 0, 0)),
            pl.BlockSpec((1, 4, t_pad), lambda b, i: (b, 0, 0)),
            pl.BlockSpec((1, t_pad, c_pad), lambda b, i: (b, 0, 0)),
        ],
        out_specs=pl.BlockSpec((1, _TM, c_pad), lambda b, i: (b, i, 0)),
        compiler_params=pltpu.CompilerParams(
            dimension_semantics=("parallel", "parallel")),
    )(jnp.asarray(bh, jnp.float32),
      jnp.asarray(bo, jnp.float32),
      jnp.asarray(th_t, jnp.float32),
      jnp.asarray(to_t, jnp.float32),
      jnp.asarray(tgt_onehot, jnp.bfloat16))


def _prior_batched(onehot_cls, sp, class_mask_bf16):
    v, m_pad, k_pad = onehot_cls.shape
    c_pad = class_mask_bf16.shape[1]
    grid = (v, m_pad // _TM)
    return pl.pallas_call(
        _prior_kernel,
        out_shape=jax.ShapeDtypeStruct((v, 2, m_pad, c_pad), jnp.float32),
        grid=grid,
        in_specs=[
            pl.BlockSpec((1, _TM, k_pad), lambda b, i: (b, i, 0)),
            pl.BlockSpec((1, _TM, 2), lambda b, i: (b, i, 0)),
            pl.BlockSpec((k_pad, c_pad), lambda b, i: (0, 0)),
        ],
        out_specs=pl.BlockSpec((1, 2, _TM, c_pad), lambda b, i: (b, 0, i, 0)),
        compiler_params=pltpu.CompilerParams(
            dimension_semantics=("parallel", "parallel")),
    )(jnp.asarray(onehot_cls, jnp.bfloat16),
      jnp.asarray(sp, jnp.float32),
      class_mask_bf16)


# ---------------------------------------------------------------------------
# PairGenerator (forward-pass port)
# ---------------------------------------------------------------------------

class PairGeneratorPallas:
    def __init__(self, cfg, object_class_to_target_class):
        self.human_idx = 49 if cfg.data.dataset == 'hico' else 1
        self.num_cls = 600 if cfg.data.dataset == 'hico' else 0
        self.box_nms_thresh = cfg.model.box_nms_thresh
        self.box_score_thresh = cfg.model.box_score_thresh
        self.max_human = cfg.model.max_human
        self.max_object = cfg.model.max_object
        self.object_class_to_target_class = object_class_to_target_class
        self.training = False  # eval mode: append_gt=False, p=2.8

        num_obj_cls = max(object_class_to_target_class.keys()) + 1
        self._k_pad = max(128, _round_up(num_obj_cls, 128))
        self._c_pad = max(128, _round_up(max(self.num_cls, 1), 128))
        max_pairs = self.max_human * (self.max_human + self.max_object - 1)
        self._m_pad = max(_TM, _round_up(max_pairs, _TM))

        mask = np.zeros((self._k_pad, self._c_pad), np.float32)
        for c, tgt_list in object_class_to_target_class.items():
            for t in tgt_list:
                mask[c, t] = 1.0
        # 0/1 valued -> bf16 is lossless; feed the MXU its native dtype.
        self.class_mask = jnp.asarray(mask, jnp.bfloat16)

    # InteractionHead.preprocess (per image) — host-side index manipulation.
    def _preprocess_one(self, det, target, append_gt=None):
        boxes = np.asarray(det['boxes'], np.float32)
        labels = np.asarray(det['labels'], np.int32)
        scores = np.asarray(det['scores'], np.float32)
        if append_gt is None:
            append_gt = self.training
        if append_gt and target is not None:
            nt = np.asarray(target['boxes_h']).shape[0]
            boxes = np.concatenate([np.asarray(target['boxes_h'], np.float32),
                                    np.asarray(target['boxes_o'], np.float32), boxes])
            scores = np.concatenate([np.ones(2 * nt, np.float32), scores])
            labels = np.concatenate([np.full(nt, self.human_idx, np.int32),
                                     np.asarray(target['object'], np.int32), labels])
        active = np.nonzero(scores >= self.box_score_thresh)[0]
        # TODO(synk): torchvision.ops.batched_nms is a sequential, data-dependent
        # suppression with no clean Pallas equivalent; omitted (all thresholded boxes kept).
        order = np.argsort(-scores[active], kind='stable')
        active = active[order]
        h_idx = np.nonzero(labels[active] == self.human_idx)[0][:self.max_human]
        o_idx = np.nonzero(labels[active] != self.human_idx)[0][:self.max_object]
        keep = np.concatenate([h_idx, o_idx])
        active = active[keep]
        return (boxes[active].reshape(-1, 4),
                labels[active].reshape(-1),
                scores[active].reshape(-1))

    def forward(self, detections, targets):
        p = 1.0 if self.training else 2.8

        # -------- host: per-image preprocessing + pair enumeration -----------
        infos = []
        for b_idx, det in enumerate(detections):
            tgt = targets[b_idx] if targets is not None else None
            coords, labels, scores = self._preprocess_one(det, tgt)
            n = coords.shape[0]
            n_h = int(np.sum(labels == self.human_idx))
            if n_h == 0 or n <= 1:
                infos.append(None)
                continue
            if not np.all(labels[:n_h] == self.human_idx):
                raise ValueError('Human detections are not permuted to the top')
            xg, yg = np.meshgrid(np.arange(n_h), np.arange(n), indexing='ij')
            x_keep, y_keep = np.nonzero(xg != yg)
            if len(x_keep) == 0:
                raise ValueError('There are no valid human-object pairs')
            infos.append(dict(coords=coords, labels=labels, scores=scores,
                              x_keep=x_keep, y_keep=y_keep, tgt=tgt))

        valid = [i for i, inf in enumerate(infos) if inf is not None]
        v = len(valid)
        prior_dev = None
        labels_dev = None

        if v > 0:
            max_m = max(len(infos[i]['x_keep']) for i in valid)
            m_pad = max(self._m_pad, _round_up(max_m, _TM))
            k_pad, c_pad = self._k_pad, self._c_pad

            # -------- host: gather + pow + one-hot, pack into static buffers ----
            bh = np.zeros((v, m_pad, 4), np.float32)
            bo = np.zeros((v, m_pad, 4), np.float32)
            sp = np.zeros((v, m_pad, 2), np.float32)
            oh_cls = np.zeros((v, m_pad, k_pad), np.float32)
            for vb, i in enumerate(valid):
                inf = infos[i]
                m = len(inf['x_keep'])
                bh[vb, :m] = inf['coords'][inf['x_keep']]
                bo[vb, :m] = inf['coords'][inf['y_keep']]
                sp[vb, :m, 0] = inf['scores'][inf['x_keep']] ** p
                sp[vb, :m, 1] = inf['scores'][inf['y_keep']] ** p
                oh_cls[vb, np.arange(m), inf['labels'][inf['y_keep']]] = 1.0

            prior_dev = _prior_batched(oh_cls, sp, self.class_mask)

            if targets is not None:
                t_max = max(np.asarray(infos[i]['tgt']['boxes_h']).shape[0]
                            for i in valid)
                t_pad = max(128, _round_up(t_max, 128))
                th_t = np.zeros((v, 4, t_pad), np.float32)
                to_t = np.zeros((v, 4, t_pad), np.float32)
                toh = np.zeros((v, t_pad, c_pad), np.float32)
                for vb, i in enumerate(valid):
                    tgt = infos[i]['tgt']
                    tb_h = np.asarray(tgt['boxes_h'], np.float32)
                    tb_o = np.asarray(tgt['boxes_o'], np.float32)
                    t = tb_h.shape[0]
                    th_t[vb, :, :t] = tb_h.T
                    to_t[vb, :, :t] = tb_o.T
                    tl = np.asarray(tgt['labels'], np.int64)
                    toh[vb, np.arange(t), tl] = 1.0
                labels_dev = _associate_batched(bh, bo, th_t, to_t, toh)

        # -------- assemble per-image outputs (slice away padding) -------------
        vb_of = {i: vb for vb, i in enumerate(valid)}
        all_boxes_h, all_boxes_o = [], []
        all_object_class, all_labels, all_prior = [], [], []
        for i, inf in enumerate(infos):
            if inf is None:
                all_boxes_h.append(jnp.zeros((0, 4), jnp.float32))
                all_boxes_o.append(jnp.zeros((0, 4), jnp.float32))
                all_object_class.append(jnp.zeros((0,), jnp.int32))
                all_prior.append(jnp.zeros((2, 0, self.num_cls), jnp.float32))
                all_labels.append(jnp.zeros((0, self.num_cls), jnp.float32))
                continue
            vb = vb_of[i]
            m = len(inf['x_keep'])
            all_boxes_h.append(jnp.asarray(inf['coords'][inf['x_keep']], jnp.float32))
            all_boxes_o.append(jnp.asarray(inf['coords'][inf['y_keep']], jnp.float32))
            all_object_class.append(jnp.asarray(inf['labels'][inf['y_keep']], jnp.int32))
            all_prior.append(prior_dev[vb, :, :m, :self.num_cls])
            if targets is not None:
                all_labels.append(labels_dev[vb, :m, :self.num_cls])

        return all_boxes_h, all_boxes_o, all_object_class, all_labels, all_prior


# ---------------------------------------------------------------------------
# Demo
# ---------------------------------------------------------------------------

if __name__ == "__main__":
    cfg = types.SimpleNamespace(
        data=types.SimpleNamespace(dataset='hico'),
        model=types.SimpleNamespace(box_nms_thresh=0.5, box_score_thresh=0.2,
                                    max_human=15, max_object=15))

    # Deterministic synthetic object-class -> target-(hoi)-class mapping (80 -> 600).
    num_obj_cls = 80
    obj2tgt = {c: [int((c * 7) % 600), int((c * 13 + 5) % 600)] for c in range(num_obj_cls)}
    gen = PairGeneratorPallas(cfg, obj2tgt)

    key = jax.random.PRNGKey(0)
    k0, k1, k2, k3, k4, k5 = jax.random.split(key, 6)

    def rand_boxes(k, n):
        ka, kb = jax.random.split(k)
        xy = jax.random.uniform(ka, (n, 2), minval=0.0, maxval=32.0)
        wh = jax.random.uniform(kb, (n, 2), minval=8.0, maxval=32.0)
        return np.asarray(jnp.concatenate([xy, xy + wh], axis=1), np.float32)

    boxes0 = rand_boxes(k0, 6)
    scores0 = np.asarray(jax.random.uniform(k1, (6,), minval=0.3, maxval=0.95), np.float32)
    labels0 = np.array([49, 17, 49, 3, 49, 8], np.int32)      # 49 = human (hico)

    boxes1 = rand_boxes(k2, 5)
    scores1 = np.asarray(jax.random.uniform(k3, (5,), minval=0.3, maxval=0.95), np.float32)
    labels1 = np.array([12, 49, 5, 49, 49], np.int32)

    detections = [
        dict(boxes=boxes0, labels=labels0, scores=scores0),
        dict(boxes=boxes1, labels=labels1, scores=scores1),
    ]

    # Ground-truth targets reuse some detection boxes so IoU >= 0.5 matches occur.
    targets = [
        dict(boxes_h=boxes0[np.array([0, 2])], boxes_o=boxes0[np.array([1, 3])],
             labels=np.asarray(jax.random.randint(k4, (2,), 0, 600), np.int32),
             object=np.array([17, 3], np.int32)),
        dict(boxes_h=boxes1[np.array([1, 3])], boxes_o=boxes1[np.array([0, 2])],
             labels=np.asarray(jax.random.randint(k5, (2,), 0, 600), np.int32),
             object=np.array([12, 5], np.int32)),
    ]

    out = gen.forward(detections, targets)
    out = jax.block_until_ready(out)

    all_boxes_h, all_boxes_o, all_object_class, all_labels, all_prior = out
    expected_pairs = [3 * 5, 3 * 4]   # n_h * (n - 1) per image
    for b in range(len(detections)):
        m = all_boxes_h[b].shape[0]
        assert m == expected_pairs[b]
        assert all_boxes_o[b].shape == (m, 4)
        assert all_object_class[b].shape == (m,)
        assert all_labels[b].shape == (m, 600)
        assert all_prior[b].shape == (2, m, 600)
        # Each pair's object class maps to exactly 2 distinct target classes in
        # the demo mapping, and every score is > 0  =>  4*m nonzero prior entries.
        assert int(jnp.sum(all_prior[b] > 0)) == 4 * m
        assert float(jnp.max(all_prior[b])) < 1.0
        # Each GT pair reuses detection boxes exactly (IoU = 1), so at least one
        # interaction label must be set per image.
        assert float(jnp.sum(all_labels[b])) >= 1.0
        # Padding rows/classes must not leak NaNs or negatives.
        assert bool(jnp.all(jnp.isfinite(all_prior[b])))
        assert bool(jnp.all(all_labels[b] >= 0.0))

    print("KERNEL_OK")
</pallas_src>

<mosaic_0001>
module attributes {stable_mosaic.version = 11 : i64} {
  func.func @_prior_kernel(%arg0: i32, %arg1: i32, %arg2: memref<1x128x128xbf16, #tpu.memory_space<vmem>>, %arg3: memref<1x128x2xf32, #tpu.memory_space<vmem>>, %arg4: memref<128x640xbf16, #tpu.memory_space<vmem>>, %arg5: memref<1x2x128x640xf32, #tpu.memory_space<vmem>>) attributes {dimension_semantics = [#tpu.dimension_semantics<parallel>, #tpu.dimension_semantics<parallel>], iteration_bounds = array<i64: 2, 4>, scalar_prefetch = 0 : i64, scratch_operands = 0 : i64, tpu.core_type = #tpu.core_type<tc>, window_params = [{transform_indices = @transform_0, window_bounds = array<i64: 1, 128, 128>}, {transform_indices = @transform_1, window_bounds = array<i64: 1, 128, 2>}, {pipeline_mode = #tpu.pipeline_mode<synchronous>, transform_indices = @transform_2, window_bounds = array<i64: 128, 640>}, {transform_indices = @transform_3, window_bounds = array<i64: 1, 2, 128, 640>}]} {
    %c0 = arith.constant 0 : index
    %c0_0 = arith.constant 0 : index
    %c0_1 = arith.constant 0 : index
    %0 = vector.load %arg2[%c0, %c0_0, %c0_1] : memref<1x128x128xbf16, #tpu.memory_space<vmem>>, vector<1x128x128xbf16>
    %1 = vector.shape_cast %0 : vector<1x128x128xbf16> to vector<128x128xbf16>
    %c0_2 = arith.constant 0 : index
    %c0_3 = arith.constant 0 : index
    %2 = vector.load %arg4[%c0_2, %c0_3] : memref<128x640xbf16, #tpu.memory_space<vmem>>, vector<128x640xbf16>
    %cst = arith.constant dense<0.000000e+00> : vector<128x640xf32>
    %3 = tpu.matmul %1, %2, %cst {dimension_numbers = #tpu.dot_dimension_numbers<[1], [0], [0], [1], [0, 0, 1, 1], [], []>} : vector<128x128xbf16>, vector<128x640xbf16>, vector<128x640xf32> -> vector<128x640xf32>
    %c0_4 = arith.constant 0 : index
    %c0_5 = arith.constant 0 : index
    %c0_6 = arith.constant 0 : index
    %4 = vector.load %arg3[%c0_4, %c0_5, %c0_6] : memref<1x128x2xf32, #tpu.memory_space<vmem>>, vector<1x128x2xf32>
    %5 = vector.shape_cast %4 : vector<1x128x2xf32> to vector<128x2xf32>
    %6 = vector.extract_strided_slice %5 {offsets = [0, 0], sizes = [128, 1], strides = [1, 1]} : vector<128x2xf32> to vector<128x1xf32>
    %7 = vector.broadcast %6 : vector<128x1xf32> to vector<128x640xf32>
    %8 = arith.mulf %3, %7 : vector<128x640xf32>
    %c0_7 = arith.constant 0 : index
    %c0_8 = arith.constant 0 : index
    %c0_9 = arith.constant 0 : index
    %c0_10 = arith.constant 0 : index
    %9 = vector.load %arg5[%c0_7, %c0_8, %c0_9, %c0_10] : memref<1x2x128x640xf32, #tpu.memory_space<vmem>>, vector<1x1x128x640xf32>
    %10 = vector.shape_cast %9 : vector<1x1x128x640xf32> to vector<128x640xf32>
    %11 = vector.shape_cast %8 : vector<128x640xf32> to vector<1x1x128x640xf32>
    tpu.vector_store %arg5[%c0_7, %c0_8, %c0_9, %c0_10], %11 {strides = array<i32>} : memref<1x2x128x640xf32, #tpu.memory_space<vmem>>, vector<1x1x128x640xf32>,
    %12 = vector.extract_strided_slice %5 {offsets = [0, 1], sizes = [128, 1], strides = [1, 1]} : vector<128x2xf32> to vector<128x1xf32>
    %13 = vector.broadcast %12 : vector<128x1xf32> to vector<128x640xf32>
    %14 = arith.mulf %3, %13 : vector<128x640xf32>
    %c0_11 = arith.constant 0 : index
    %c1 = arith.constant 1 : index
    %c0_12 = arith.constant 0 : index
    %c0_13 = arith.constant 0 : index
    %15 = vector.load %arg5[%c0_11, %c1, %c0_12, %c0_13] : memref<1x2x128x640xf32, #tpu.memory_space<vmem>>, vector<1x1x128x640xf32>
    %16 = vector.shape_cast %15 : vector<1x1x128x640xf32> to vector<128x640xf32>
    %17 = vector.shape_cast %14 : vector<128x640xf32> to vector<1x1x128x640xf32>
    tpu.vector_store %arg5[%c0_11, %c1, %c0_12, %c0_13], %17 {strides = array<i32>} : memref<1x2x128x640xf32, #tpu.memory_space<vmem>>, vector<1x1x128x640xf32>,
    return
  }
  func.func @transform_0(%arg0: i32, %arg1: i32) -> (i32, i32, i32) {
    %c0_i32 = arith.constant 0 : i32
    %c0_i32_0 = arith.constant 0 : i32
    return %arg0, %arg1, %c0_i32 : i32, i32, i32
  }
  func.func @transform_1(%arg0: i32, %arg1: i32) -> (i32, i32, i32) {
    %c0_i32 = arith.constant 0 : i32
    %c0_i32_0 = arith.constant 0 : i32
    return %arg0, %arg1, %c0_i32 : i32, i32, i32
  }
  func.func @transform_2(%arg0: i32, %arg1: i32) -> (i32, i32) {
    %c0_i32 = arith.constant 0 : i32
    %c0_i32_0 = arith.constant 0 : i32
    %c0_i32_1 = arith.constant 0 : i32
    return %c0_i32, %c0_i32_0 : i32, i32
  }
  func.func @transform_3(%arg0: i32, %arg1: i32) -> (i32, i32, i32, i32) {
    %c0_i32 = arith.constant 0 : i32
    %c0_i32_0 = arith.constant 0 : i32
    %c0_i32_1 = arith.constant 0 : i32
    return %arg0, %c0_i32, %arg1, %c0_i32_0 : i32, i32, i32, i32
  }
}

</mosaic_0001>

<llo_original>
// kernel: tpu_custom_call.1
$region0: #{tpu_custom_call.1}
  #allocation0 [shape = 'u32[]', space=smem, size = 0x4, offset = 0x4, fixed_abs, tag = 'smem constant byte address 0x4 - core index']
  #allocation1 [shape = 'u32[72,128]{1,0:T(1,128)}', space=vmem, size = 0x9000, scoped, tag = 'internal scratch']
  #allocation8 [shape = 's32[]', space=sflag, size = 0x4, offset = 0, fixed_abs, tag = 'sflag constant byte address 0x0 - dummy sync flag']
  %s0 = inlined_call_operand.hbm [shape: bf16[2,512,128], index: 0, kind: input, shape index: {}]
  %s1 = inlined_call_operand.vmem [shape: f32[2,512,2], index: 1, kind: input, shape index: {}]
  %s2 = inlined_call_operand.hbm [shape: bf16[128,640], index: 2, kind: input, shape index: {}]
  %s3 = inlined_call_operand.hbm [shape: f32[2,2,512,640], index: 3, kind: output, shape index: {}]
  %s4 = sld [smem:[#allocation0]]
  $region53: #{tpu_custom_call.1} parent=0
    _
  %s6 = ssub.s32 1, %s4
  %s7 = scalar_select 0, %s6, %s4
  $region1: #{tpu_custom_call.1} parent=0
    #allocation2 [shape = 'u8[65536]{0}', space=vmem, size = 0x10000, scoped, tag = 'input window, operand 0']
    #allocation3 [shape = 's32[2]{0}', space=sflag, size = 0x8, scoped, tag = 'scoped memory for tpu_custom_call.1']
    #allocation4 [shape = 's32[2]{0}', space=sflag, size = 0x8, scoped, tag = 'scoped memory for tpu_custom_call.1']
    #allocation5 [shape = 'u8[163840]{0}', space=vmem, size = 0x28000, scoped, tag = 'input window, operand 2, single buffered']
    #allocation6 [shape = 's32[1]{0}', space=sflag, size = 0x4, scoped, tag = 'scoped memory for tpu_custom_call.1']
    #allocation7 [shape = 'u8[1310720]{0}', space=vmem, size = 0x140000, scoped, tag = 'output window, operand 0']
    %8 = vsyncpa [#allocation3], 0
    %s9 = scalar_lea.sflag [#allocation3], 1
    %10 = vsyncpa %s9, 0
    %11 = vsyncpa [#allocation6], 0
    %12 = vsyncpa [#allocation4], 0
    %s13 = scalar_lea.sflag [#allocation4], 1
    %14 = vsyncpa %s13, 0
    loop: start=0, step=1, limit=10
    $region2: #{tpu_custom_call.1} parent=1 // loop_pre_header
      _
    $region3: #{tpu_custom_call.1} parent=1 // loop_header
      %s16 = sphi 0, %s20
      %p17 = scmp.ge.s32.totalorder %s16, 10
      %s23 = sphi 0, %s35
      %s24 = sphi 0, %s31
      %s25 = sphi 0, %s23
      %s26 = sphi 0, %s24
      %s27 = sphi 0, %s25
      %s28 = sphi 0, %s26
      %s40 = sphi 0, %s42
      %s43 = sphi 0, %s40
      %s44 = sphi 0, %s43
      %s60 = sphi 0, %s44
      %s68 = sphi 0, %s70
      %s71 = sphi 0, %s68
      %s72 = sphi 0, %s71
      %s88 = sphi 0, %s72
      %s92 = sphi 0, %s92
      %s94 = sphi 0, %s92
      %s95 = sphi 0, %s94
      %s109 = sphi 0, %s95
      %s117 = sphi 0, %s119
      %s120 = sphi 0, %s117
      %s121 = sphi 0, %s120
      %s137 = sphi 0, %s121
    $region4: #{tpu_custom_call.1} parent=1 // loop_header_branch
      %19 = sbr.rel (%p17) target = $region8
    $region5: #{tpu_custom_call.1} parent=1 // loop_body
      %s21 = ssub.s32 %s16, 1
      %s22 = ssub.s32 %s16, 2
      %s29 = sadd.s32 1, %s24
      %p30 = scmp.ge.s32.totalorder %s29, 4
      %s31 = scalar_select %p30, 0, %s29
      %s32 = sadd.s32 1, %s23
      %s33 = scalar_select %p30, %s32, %s23
      %p34 = scmp.ge.s32.totalorder %s33, 2
      %s35 = scalar_select %p34, 0, %s33
      %s36 = ssub.s32 %s23, %s35
      %s37 = ssub.s32 %s24, %s31
      %s38 = sor.u32 %s36, %s37
      %p39 = scmp.eq.s32.totalorder %s38, 0
      %s41 = sadd.s32 %s40, 1
      %s42 = scalar_select %p39, %s40, %s41
      %p45 = pneg %p39
      %p46 = scmp.eq.s32.totalorder %s16, 7
      %p47 = por %p45, %p46
      %p48 = scmp.ne.s32.totalorder %s40, %s43
      %p49 = scmp.eq.s32.totalorder %s16, 0
      %p50 = por %p48, %p49
      %p51 = scmp.ne.s32.totalorder %s40, %s43
      %p52 = scmp.eq.s32.totalorder %s21, 7
      %p53 = por %p51, %p52
      %p54 = scmp.ne.s32.totalorder %s43, %s44
      %p55 = scmp.eq.s32.totalorder %s21, 0
      %p56 = por %p54, %p55
      %p57 = scmp.ne.s32.totalorder %s43, %s44
      %p58 = scmp.eq.s32.totalorder %s22, 7
      %p59 = por %p57, %p58
      %p61 = scmp.ne.s32.totalorder %s44, %s60
      %p62 = scmp.eq.s32.totalorder %s22, 0
      %p63 = por %p61, %p62
      %s64 = ssub.s32 %s23, %s35
      %s65 = ssub.s32 %s24, %s31
      %s66 = sor.u32 %s64, %s65
      %p67 = scmp.eq.s32.totalorder %s66, 0
      %s69 = sadd.s32 %s68, 1
      %s70 = scalar_select %p67, %s68, %s69
      %p73 = pneg %p67
      %p74 = scmp.eq.s32.totalorder %s16, 7
      %p75 = por %p73, %p74
      %p76 = scmp.ne.s32.totalorder %s68, %s71
      %p77 = scmp.eq.s32.totalorder %s16, 0
      %p78 = por %p76, %p77
      %p79 = scmp.ne.s32.totalorder %s68, %s71
      %p80 = scmp.eq.s32.totalorder %s21, 7
      %p81 = por %p79, %p80
      %p82 = scmp.ne.s32.totalorder %s71, %s72
      %p83 = scmp.eq.s32.totalorder %s21, 0
      %p84 = por %p82, %p83
      %p85 = scmp.ne.s32.totalorder %s71, %s72
      %p86 = scmp.eq.s32.totalorder %s22, 7
      %p87 = por %p85, %p86
      %p89 = scmp.ne.s32.totalorder %s72, %s88
      %p90 = scmp.eq.s32.totalorder %s22, 0
      %p91 = por %p89, %p90
      %s93 = sadd.s32 %s92, 1
      %p96 = scmp.eq.s32.totalorder %s16, 7
      %p97 = scmp.ne.s32.totalorder %s92, %s94
      %p98 = scmp.eq.s32.totalorder %s16, 0
      %p99 = por %p97, %p98
      %p100 = scmp.ne.s32.totalorder %s92, %s94
      %p101 = scmp.eq.s32.totalorder %s21, 7
      %p102 = por %p100, %p101
      %p103 = scmp.ne.s32.totalorder %s94, %s95
      %p104 = scmp.eq.s32.totalorder %s21, 0
      %p105 = por %p103, %p104
      %p106 = scmp.ne.s32.totalorder %s94, %s95
      %p107 = scmp.eq.s32.totalorder %s22, 7
      %p108 = por %p106, %p107
      %p110 = scmp.ne.s32.totalorder %s95, %s109
      %p111 = scmp.eq.s32.totalorder %s22, 0
      %p112 = por %p110, %p111
      %s113 = ssub.s32 %s23, %s35
      %s114 = ssub.s32 %s24, %s31
      %s115 = sor.u32 %s113, %s114
      %p116 = scmp.eq.s32.totalorder %s115, 0
      %s118 = sadd.s32 %s117, 1
      %s119 = scalar_select %p116, %s117, %s118
      %p122 = pneg %p116
      %p123 = scmp.eq.s32.totalorder %s16, 7
      %p124 = por %p122, %p123
      %p125 = scmp.ne.s32.totalorder %s117, %s120
      %p126 = scmp.eq.s32.totalorder %s16, 0
      %p127 = por %p125, %p126
      %p128 = scmp.ne.s32.totalorder %s117, %s120
      %p129 = scmp.eq.s32.totalorder %s21, 7
      %p130 = por %p128, %p129
      %p131 = scmp.ne.s32.totalorder %s120, %s121
      %p132 = scmp.eq.s32.totalorder %s21, 0
      %p133 = por %p131, %p132
      %p134 = scmp.ne.s32.totalorder %s120, %s121
      %p135 = scmp.eq.s32.totalorder %s22, 7
      %p136 = por %p134, %p135
      %p138 = scmp.ne.s32.totalorder %s121, %s137
      %p139 = scmp.eq.s32.totalorder %s22, 0
      %p140 = por %p138, %p139
      %p141 = scmp.le.s32.totalorder 1, %s16
      %p142 = scmp.lt.s32.totalorder %s16, 9
      %p143 = pnand %p141, %p142
      %p144 = pneg %p143
      // Predicated region
      $region9: #{tpu_custom_call.1} parent=5 // pred_check
        _
      $region10: #{tpu_custom_call.1} parent=5 // pred_check_branch
        %146 = sbr.rel (%p143) target = $region12
      $region11: #{tpu_custom_call.1} parent=5 // pred_region
        %s147 = ssub.s32 %s16, 1
        // Predicated region
        $region13: #{tpu_custom_call.1} parent=11 // pred_check
          %p148 = pneg %p105
        $region14: #{tpu_custom_call.1} parent=11 // pred_check_branch
          %150 = sbr.rel (%p148) target = $region16
        $region15: #{tpu_custom_call.1} parent=11 // pred_region
          %152 = vsyncadd [#allocation6], 0
          %s153 = sshll.u32 %s2, 4
          %s154 = int_to_ptr.hbm [resolvable:$true] %s153
          %s155 = sshll.u32 [#allocation5], 4
          %s156 = int_to_ptr.vmem [resolvable:$true] %s155
          %161 = dma.hbm_to_vmem [thread:$0]  %s154, 5120, %s156, [#allocation6], 320, 320, 20
        $region16: #{tpu_custom_call.1} parent=11 // pred_fallthru
          _
      $region12: #{tpu_custom_call.1} parent=5 // pred_fallthru
        _
      %p162 = scmp.lt.s32.totalorder %s16, 8
      // Predicated region
      $region17: #{tpu_custom_call.1} parent=5 // pred_check
        %p163 = pneg %p162
      $region18: #{tpu_custom_call.1} parent=5 // pred_check_branch
        %165 = sbr.rel (%p163) target = $region20
      $region19: #{tpu_custom_call.1} parent=5 // pred_region
        // Predicated region
        $region21: #{tpu_custom_call.1} parent=19 // pred_check
          %p166 = pneg %p50
        $region22: #{tpu_custom_call.1} parent=19 // pred_check_branch
          %168 = sbr.rel (%p166) target = $region24
        $region23: #{tpu_custom_call.1} parent=19 // pred_region
          %s169 = sand.u32 %s40, 1
          %s170 = scalar_lea.sflag [#allocation3], %s169
          %s171 = sand.u32 %s40, 1
          %s172 = smul.addr %s171, 64
          %s173 = scalar_lea.vmem [#allocation2], %s172
          %s174 = smul.u32 16, %s24
          %176 = vsyncadd %s170, 0
          %s177 = smul.addr %s23, 64
          %s178 = sadd.s32 %s174, %s177
          %s179 = smul.addr %s178, 4
          %s180 = scalar_lea.hbm %s0, %s179
          %s181 = sshll.u32 %s180, 4
          %s182 = int_to_ptr.hbm [resolvable:$true] %s181
          %s183 = sshll.u32 %s173, 4
          %s184 = int_to_ptr.vmem [resolvable:$true] %s183
          %189 = dma.hbm_to_vmem [thread:$0]  %s182, 1024, %s184, %s170, 64, 64, 4
        $region24: #{tpu_custom_call.1} parent=19 // pred_fallthru
          _
        // Predicated region
        $region25: #{tpu_custom_call.1} parent=19 // pred_check
          %p190 = pneg %p78
        $region26: #{tpu_custom_call.1} parent=19 // pred_check_branch
          %192 = sbr.rel (%p190) target = $region28
        $region27: #{tpu_custom_call.1} parent=19 // pred_region
          %s193 = smul.u32 16, %s24
          %p194 = scmp.lt.s32.totalorder %s23, 1
          %s195 = scalar_select %p194, %s23, 1
          %p196 = scmp.lt.s32.totalorder %s193, 63
          %s197 = scalar_select %p196, %s193, 63
          %s198 = smul.addr %s195, 64
          %s199 = sadd.s32 %s197, %s198
          %s200 = smul.addr %s199, 8
          %s201 = scalar_lea.vmem %s1, %s200
          %s202 = smul.u32 16, %s24
        $region28: #{tpu_custom_call.1} parent=19 // pred_fallthru
          _
      $region20: #{tpu_custom_call.1} parent=5 // pred_fallthru
        _
      %p203 = scmp.le.s32.totalorder 1, %s16
      %p204 = scmp.lt.s32.totalorder %s16, 9
      %p205 = pnand %p203, %p204
      %p206 = pneg %p205
      // Predicated region
      $region29: #{tpu_custom_call.1} parent=5 // pred_check
        _
      $region30: #{tpu_custom_call.1} parent=5 // pred_check_branch
        %208 = sbr.rel (%p205) target = $region32
      $region31: #{tpu_custom_call.1} parent=5 // pred_region
        %s209 = ssub.s32 %s16, 1
        %s210 = sand.u32 %s43, 1
        %s211 = scalar_lea.sflag [#allocation3], %s210
        %s212 = sand.u32 %s43, 1
        %s213 = smul.addr %s212, 64
        %s214 = scalar_lea.vmem [#allocation2], %s213
        // Predicated region
        $region33: #{tpu_custom_call.1} parent=31 // pred_check
          %p215 = pneg %p56
        $region34: #{tpu_custom_call.1} parent=31 // pred_check_branch
          %217 = sbr.rel (%p215) target = $region36
        $region35: #{tpu_custom_call.1} parent=31 // pred_region
          %219 = dma.done %s211, 1024
        $region36: #{tpu_custom_call.1} parent=31 // pred_fallthru
          _
        // Predicated region
        $region37: #{tpu_custom_call.1} parent=31 // pred_check
          %p220 = pneg %p105
        $region38: #{tpu_custom_call.1} parent=31 // pred_check_branch
          %222 = sbr.rel (%p220) target = $region40
        $region39: #{tpu_custom_call.1} parent=31 // pred_region
          %224 = dma.done [#allocation6], 5120
        $region40: #{tpu_custom_call.1} parent=31 // pred_fallthru
          _
        %s225 = sand.u32 %s43, 1
        %s226 = scalar_lea.sflag [#allocation3], %s225
        %s227 = sand.u32 %s43, 1
        %s228 = smul.addr %s227, 64
        %s229 = scalar_lea.vmem [#allocation2], %s228
        %p230 = pneg %p56
        %p231 = pneg %p53
        %s232 = smul.u32 16, %s26
        %p233 = scmp.lt.s32.totalorder %s25, 1
        %s234 = scalar_select %p233, %s25, 1
        %p235 = scmp.lt.s32.totalorder %s232, 63
        %s236 = scalar_select %p235, %s232, 63
        %s237 = smul.addr %s234, 64
        %s238 = sadd.s32 %s236, %s237
        %s239 = smul.addr %s238, 8
        %s240 = scalar_lea.vmem %s1, %s239
        %p241 = pneg %p84
        %p242 = pneg %p81
        %p243 = pneg %p105
        %p244 = pneg %p102
        %p245 = pneg %p133
        %p246 = pneg %p130
        %s247 = sand.u32 %s120, 1
        %s248 = scalar_lea.sflag [#allocation4], %s247
        %s249 = sand.u32 %s120, 1
        %s250 = smul.addr %s249, 1280
        %s251 = scalar_lea.vmem [#allocation7], %s250
        %s252 = smul.u32 16, %s26
        %s253 = smul.u32 16, %s26
        %p254 = scmp.lt.s32.totalorder %s25, 1
        %s255 = scalar_select %p254, %s25, 1
        %p256 = scmp.lt.s32.totalorder %s253, 63
        %s257 = scalar_select %p256, %s253, 63
        %s258 = smul.addr %s255, 64
        %s259 = sadd.s32 %s257, %s258
        %s260 = smul.addr %s259, 8
        %s261 = scalar_lea.vmem %s1, %s260
        %s262 = smul.u32 16, %s26
        %s263 = smul.u32 16, %s26
        %v264 = vld [vmem:[%s214] sm:$0xf]
        %v265 = vld [vmem:[%s214 + $0x4] sm:$0xf]
        %v266 = vld [vmem:[%s214 + $0x8] sm:$0xf]
        %v267 = vld [vmem:[%s214 + $0xc] sm:$0xf]
        %v268 = vld [vmem:[%s214 + $0x10] sm:$0xf]
        %v269 = vld [vmem:[%s214 + $0x14] sm:$0xf]
        %v270 = vld [vmem:[%s214 + $0x18] sm:$0xf]
        %v271 = vld [vmem:[%s214 + $0x1c] sm:$0xf]
        %v272 = vld [vmem:[%s214 + $0x20] sm:$0xf]
        %v273 = vld [vmem:[%s214 + $0x24] sm:$0xf]
        %v274 = vld [vmem:[%s214 + $0x28] sm:$0xf]
        %v275 = vld [vmem:[%s214 + $0x2c] sm:$0xf]
        %v276 = vld [vmem:[%s214 + $0x30] sm:$0xf]
        %v277 = vld [vmem:[%s214 + $0x34] sm:$0xf]
        %v278 = vld [vmem:[%s214 + $0x38] sm:$0xf]
        %v279 = vld [vmem:[%s214 + $0x3c] sm:$0xf]
        %v280 = vld [vmem:[#allocation5] sm:$0xff]
        %v281 = vld [vmem:[#allocation5 + $0x8] sm:$0xff]
        %v282 = vld [vmem:[#allocation5 + $0x10] sm:$0xf]
        %v283 = vld [vmem:[#allocation5 + $0x14] sm:$0xff]
        %v284 = vld [vmem:[#allocation5 + $0x1c] sm:$0xff]
        %v285 = vld [vmem:[#allocation5 + $0x24] sm:$0xf]
        %v286 = vld [vmem:[#allocation5 + $0x28] sm:$0xff]
        %v287 = vld [vmem:[#allocation5 + $0x30] sm:$0xff]
        %v288 = vld [vmem:[#allocation5 + $0x38] sm:$0xf]
        %v289 = vld [vmem:[#allocation5 + $0x3c] sm:$0xff]
        %v290 = vld [vmem:[#allocation5 + $0x44] sm:$0xff]
        %v291 = vld [vmem:[#allocation5 + $0x4c] sm:$0xf]
        %v292 = vld [vmem:[#allocation5 + $0x50] sm:$0xff]
        %v293 = vld [vmem:[#allocation5 + $0x58] sm:$0xff]
        %v294 = vld [vmem:[#allocation5 + $0x60] sm:$0xf]
        %v295 = vld [vmem:[#allocation5 + $0x64] sm:$0xff]
        %v296 = vld [vmem:[#allocation5 + $0x6c] sm:$0xff]
        %v297 = vld [vmem:[#allocation5 + $0x74] sm:$0xf]
        %v298 = vld [vmem:[#allocation5 + $0x78] sm:$0xff]
        %v299 = vld [vmem:[#allocation5 + $0x80] sm:$0xff]
        %v300 = vld [vmem:[#allocation5 + $0x88] sm:$0xf]
        %v301 = vld [vmem:[#allocation5 + $0x8c] sm:$0xff]
        %v302 = vld [vmem:[#allocation5 + $0x94] sm:$0xff]
        %v303 = vld [vmem:[#allocation5 + $0x9c] sm:$0xf]
        %v304 = vld [vmem:[#allocation5 + $0xa0] sm:$0xff]
        %v305 = vld [vmem:[#allocation5 + $0xa8] sm:$0xff]
        %v306 = vld [vmem:[#allocation5 + $0xb0] sm:$0xf]
        %v307 = vld [vmem:[#allocation5 + $0xb4] sm:$0xff]
        %v308 = vld [vmem:[#allocation5 + $0xbc] sm:$0xff]
        %v309 = vld [vmem:[#allocation5 + $0xc4] sm:$0xf]
        %v310 = vld [vmem:[#allocation5 + $0xc8] sm:$0xff]
        %v311 = vld [vmem:[#allocation5 + $0xd0] sm:$0xff]
        %v312 = vld [vmem:[#allocation5 + $0xd8] sm:$0xf]
        %v313 = vld [vmem:[#allocation5 + $0xdc] sm:$0xff]
        %v314 = vld [vmem:[#allocation5 + $0xe4] sm:$0xff]
        %v315 = vld [vmem:[#allocation5 + $0xec] sm:$0xf]
        %v316 = vld [vmem:[#allocation5 + $0xf0] sm:$0xff]
        %v317 = vld [vmem:[#allocation5 + $0xf8] sm:$0xff]
        %v318 = vld [vmem:[#allocation5 + $0x100] sm:$0xf]
        %v319 = vld [vmem:[#allocation5 + $0x104] sm:$0xff]
        %v320 = vld [vmem:[#allocation5 + $0x10c] sm:$0xff]
        %v321 = vld [vmem:[#allocation5 + $0x114] sm:$0xf]
        %v322 = vld [vmem:[#allocation5 + $0x118] sm:$0xff]
        %v323 = vld [vmem:[#allocation5 + $0x120] sm:$0xff]
        %v324 = vld [vmem:[#allocation5 + $0x128] sm:$0xf]
        %v325 = vld [vmem:[#allocation5 + $0x12c] sm:$0xff]
        %v326 = vld [vmem:[#allocation5 + $0x134] sm:$0xff]
        %v327 = vld [vmem:[#allocation5 + $0x13c] sm:$0xf]
        %v344 = vunpack.c.l.b16 %v264
        %v345 = vunpack.c.l.b16 %v265
        %v346 = vunpack.c.l.b16 %v266
        %v347 = vunpack.c.l.b16 %v267
        %v348 = vunpack.c.l.b16 %v268
        %v349 = vunpack.c.l.b16 %v269
        %v350 = vunpack.c.l.b16 %v270
        %v351 = vunpack.c.l.b16 %v271
        %v352 = vunpack.c.l.b16 %v272
        %v353 = vunpack.c.l.b16 %v273
        %v354 = vunpack.c.l.b16 %v274
        %v355 = vunpack.c.l.b16 %v275
        %v356 = vunpack.c.l.b16 %v276
        %v357 = vunpack.c.l.b16 %v277
        %v358 = vunpack.c.l.b16 %v278
        %v359 = vunpack.c.l.b16 %v279
        %v360 = vpack.c.b16 %v345, %v344
        %v361 = vpack.c.b16 %v347, %v346
        %v362 = vpack.c.b16 %v349, %v348
        %v363 = vpack.c.b16 %v351, %v350
        %v364 = vpack.c.b16 %v353, %v352
        %v365 = vpack.c.b16 %v355, %v354
        %v366 = vpack.c.b16 %v357, %v356
        %v367 = vpack.c.b16 %v359, %v358
        %v424 = vunpack.c.l.b16 %v280
        %v425 = vunpack.c.h.b16 %v280
        %v426 = vunpack.c.l.b16 %v281
        %v427 = vunpack.c.h.b16 %v281
        %v428 = vunpack.c.l.b16 %v282
        %v429 = vunpack.c.l.b16 %v283
        %v430 = vunpack.c.h.b16 %v283
        %v431 = vunpack.c.l.b16 %v284
        %v432 = vunpack.c.h.b16 %v284
        %v433 = vunpack.c.l.b16 %v285
        %v434 = vunpack.c.l.b16 %v286
        %v435 = vunpack.c.h.b16 %v286
        %v436 = vunpack.c.l.b16 %v287
        %v437 = vunpack.c.h.b16 %v287
        %v438 = vunpack.c.l.b16 %v288
        %v439 = vunpack.c.l.b16 %v289
        %v440 = vunpack.c.h.b16 %v289
        %v441 = vunpack.c.l.b16 %v290
        %v442 = vunpack.c.h.b16 %v290
        %v443 = vunpack.c.l.b16 %v291
        %v444 = vunpack.c.l.b16 %v292
        %v445 = vunpack.c.h.b16 %v292
        %v446 = vunpack.c.l.b16 %v293
        %v447 = vunpack.c.h.b16 %v293
        %v448 = vunpack.c.l.b16 %v294
        %v449 = vunpack.c.l.b16 %v295
        %v450 = vunpack.c.h.b16 %v295
        %v451 = vunpack.c.l.b16 %v296
        %v452 = vunpack.c.h.b16 %v296
        %v453 = vunpack.c.l.b16 %v297
        %v454 = vunpack.c.l.b16 %v298
        %v455 = vunpack.c.h.b16 %v298
        %v456 = vunpack.c.l.b16 %v299
        %v457 = vunpack.c.h.b16 %v299
        %v458 = vunpack.c.l.b16 %v300
        %v459 = vunpack.c.l.b16 %v301
        %v460 = vunpack.c.h.b16 %v301
        %v461 = vunpack.c.l.b16 %v302
        %v462 = vunpack.c.h.b16 %v302
        %v463 = vunpack.c.l.b16 %v303
        %v464 = vunpack.c.l.b16 %v304
        %v465 = vunpack.c.h.b16 %v304
        %v466 = vunpack.c.l.b16 %v305
        %v467 = vunpack.c.h.b16 %v305
        %v468 = vunpack.c.l.b16 %v306
        %v469 = vunpack.c.l.b16 %v307
        %v470 = vunpack.c.h.b16 %v307
        %v471 = vunpack.c.l.b16 %v308
        %v472 = vunpack.c.h.b16 %v308
        %v473 = vunpack.c.l.b16 %v309
        %v474 = vunpack.c.l.b16 %v310
        %v475 = vunpack.c.h.b16 %v310
        %v476 = vunpack.c.l.b16 %v311
        %v477 = vunpack.c.h.b16 %v311
        %v478 = vunpack.c.l.b16 %v312
        %v479 = vunpack.c.l.b16 %v313
        %v480 = vunpack.c.h.b16 %v313
        %v481 = vunpack.c.l.b16 %v314
        %v482 = vunpack.c.h.b16 %v314
        %v483 = vunpack.c.l.b16 %v315
        %v484 = vunpack.c.l.b16 %v316
        %v485 = vunpack.c.h.b16 %v316
        %v486 = vunpack.c.l.b16 %v317
        %v487 = vunpack.c.h.b16 %v317
        %v488 = vunpack.c.l.b16 %v318
        %v489 = vunpack.c.l.b16 %v319
        %v490 = vunpack.c.h.b16 %v319
        %v491 = vunpack.c.l.b16 %v320
        %v492 = vunpack.c.h.b16 %v320
        %v493 = vunpack.c.l.b16 %v321
        %v494 = vunpack.c.l.b16 %v322
        %v495 = vunpack.c.h.b16 %v322
        %v496 = vunpack.c.l.b16 %v323
        %v497 = vunpack.c.h.b16 %v323
        %v498 = vunpack.c.l.b16 %v324
        %v499 = vunpack.c.l.b16 %v325
        %v500 = vunpack.c.h.b16 %v325
        %v501 = vunpack.c.l.b16 %v326
        %v502 = vunpack.c.h.b16 %v326
        %v503 = vunpack.c.l.b16 %v327
        %v504 = vpack.c.b16 %v429, %v424
        %v505 = vpack.c.b16 %v430, %v425
        %v506 = vpack.c.b16 %v431, %v426
        %v507 = vpack.c.b16 %v432, %v427
        %v508 = vpack.c.b16 %v433, %v428
        %v509 = vpack.c.b16 %v439, %v434
        %v510 = vpack.c.b16 %v440, %v435
        %v511 = vpack.c.b16 %v441, %v436
        %v512 = vpack.c.b16 %v442, %v437
        %v513 = vpack.c.b16 %v443, %v438
        %v514 = vpack.c.b16 %v449, %v444
        %v515 = vpack.c.b16 %v450, %v445
        %v516 = vpack.c.b16 %v451, %v446
        %v517 = vpack.c.b16 %v452, %v447
        %v518 = vpack.c.b16 %v453, %v448
        %v519 = vpack.c.b16 %v459, %v454
        %v520 = vpack.c.b16 %v460, %v455
        %v521 = vpack.c.b16 %v461, %v456
        %v522 = vpack.c.b16 %v462, %v457
        %v523 = vpack.c.b16 %v463, %v458
        %v524 = vpack.c.b16 %v469, %v464
        %v525 = vpack.c.b16 %v470, %v465
        %v526 = vpack.c.b16 %v471, %v466
        %v527 = vpack.c.b16 %v472, %v467
        %v528 = vpack.c.b16 %v473, %v468
        %v529 = vpack.c.b16 %v479, %v474
        %v530 = vpack.c.b16 %v480, %v475
        %v531 = vpack.c.b16 %v481, %v476
        %v532 = vpack.c.b16 %v482, %v477
        %v533 = vpack.c.b16 %v483, %v478
        %v534 = vpack.c.b16 %v489, %v484
        %v535 = vpack.c.b16 %v490, %v485
        %v536 = vpack.c.b16 %v491, %v486
        %v537 = vpack.c.b16 %v492, %v487
        %v538 = vpack.c.b16 %v493, %v488
        %v539 = vpack.c.b16 %v499, %v494
        %v540 = vpack.c.b16 %v500, %v495
        %v541 = vpack.c.b16 %v501, %v496
        %v542 = vpack.c.b16 %v502, %v497
        %v543 = vpack.c.b16 %v503, %v498
        %584 = vmatpush.bf16.msra.mxu0 %v539
        %585 = vmatpush.bf16.msra.mxu0 %v534
        %586 = vmatpush.bf16.msra.mxu0 %v529
        %587 = vmatpush.bf16.msra.mxu0 %v524
        %588 = vmatpush.bf16.msra.mxu0 %v519
        %589 = vmatpush.bf16.msra.mxu0 %v514
        %590 = vmatpush.bf16.msra.mxu0 %v509
        %591 = vmatpush.bf16.msra.mxu0 %v504
        %592 = vmatmul.bf16.gmra.mxu0 %v360
        %v593 = vpop.f32.mrf.mxu0
        %v594 = vadd.f32 0.0, %v593
        %v595 = vpop.f32.mrf.mxu0
        %v596 = vadd.f32 0.0, %v595
        %597 = vmatmul.bf16.gmra.mxu0 %v361
        %v598 = vpop.f32.mrf.mxu0
        %v599 = vadd.f32 0.0, %v598
        %v600 = vpop.f32.mrf.mxu0
        %v601 = vadd.f32 0.0, %v600
        %602 = vmatmul.bf16.gmra.mxu0 %v362
        %v603 = vpop.f32.mrf.mxu0
        %v604 = vadd.f32 0.0, %v603
        %v605 = vpop.f32.mrf.mxu0
        %v606 = vadd.f32 0.0, %v605
        %607 = vmatmul.bf16.gmra.mxu0 %v363
        %v608 = vpop.f32.mrf.mxu0
        %v609 = vadd.f32 0.0, %v608
        %v610 = vpop.f32.mrf.mxu0
        %v611 = vadd.f32 0.0, %v610
        %612 = vmatmul.bf16.gmra.mxu0 %v364
        %v613 = vpop.f32.mrf.mxu0
        %v614 = vadd.f32 0.0, %v613
        %v615 = vpop.f32.mrf.mxu0
        %v616 = vadd.f32 0.0, %v615
        %617 = vmatmul.bf16.gmra.mxu0 %v365
        %v618 = vpop.f32.mrf.mxu0
        %v619 = vadd.f32 0.0, %v618
        %v620 = vpop.f32.mrf.mxu0
        %v621 = vadd.f32 0.0, %v620
        %622 = vmatmul.bf16.gmra.mxu0 %v366
        %v623 = vpop.f32.mrf.mxu0
        %v624 = vadd.f32 0.0, %v623
        %v625 = vpop.f32.mrf.mxu0
        %v626 = vadd.f32 0.0, %v625
        %627 = vmatmul.bf16.gmra.mxu0 %v367
        %v628 = vpop.f32.mrf.mxu0
        %v629 = vadd.f32 0.0, %v628
        %v630 = vpop.f32.mrf.mxu0
        %v631 = vadd.f32 0.0, %v630
        %632 = vdwg.mxu0
        %633 = vmatpush.bf16.msra.mxu0 %v540
        %634 = vmatpush.bf16.msra.mxu0 %v535
        %635 = vmatpush.bf16.msra.mxu0 %v530
        %636 = vmatpush.bf16.msra.mxu0 %v525
        %637 = vmatpush.bf16.msra.mxu0 %v520
        %638 = vmatpush.bf16.msra.mxu0 %v515
        %639 = vmatpush.bf16.msra.mxu0 %v510
        %640 = vmatpush.bf16.msra.mxu0 %v505
        %641 = vmatmul.bf16.gmra.mxu0 %v360
        %v642 = vpop.f32.mrf.mxu0
        %v643 = vadd.f32 0.0, %v642
        %v644 = vpop.f32.mrf.mxu0
        %v645 = vadd.f32 0.0, %v644
        %646 = vmatmul.bf16.gmra.mxu0 %v361
        %v647 = vpop.f32.mrf.mxu0
        %v648 = vadd.f32 0.0, %v647
        %v649 = vpop.f32.mrf.mxu0
        %v650 = vadd.f32 0.0, %v649
        %651 = vmatmul.bf16.gmra.mxu0 %v362
        %v652 = vpop.f32.mrf.mxu0
        %v653 = vadd.f32 0.0, %v652
        %v654 = vpop.f32.mrf.mxu0
        %v655 = vadd.f32 0.0, %v654
        %656 = vmatmul.bf16.gmra.mxu0 %v363
        %v657 = vpop.f32.mrf.mxu0
        %v658 = vadd.f32 0.0, %v657
        %v659 = vpop.f32.mrf.mxu0
        %v660 = vadd.f32 0.0, %v659
        %661 = vmatmul.bf16.gmra.mxu0 %v364
        %v662 = vpop.f32.mrf.mxu0
        %v663 = vadd.f32 0.0, %v662
        %v664 = vpop.f32.mrf.mxu0
        %v665 = vadd.f32 0.0, %v664
        %666 = vmatmul.bf16.gmra.mxu0 %v365
        %v667 = vpop.f32.mrf.mxu0
        %v668 = vadd.f32 0.0, %v667
        %v669 = vpop.f32.mrf.mxu0
        %v670 = vadd.f32 0.0, %v669
        %671 = vmatmul.bf16.gmra.mxu0 %v366
        %v672 = vpop.f32.mrf.mxu0
        %v673 = vadd.f32 0.0, %v672
        %v674 = vpop.f32.mrf.mxu0
        %v675 = vadd.f32 0.0, %v674
        %676 = vmatmul.bf16.gmra.mxu0 %v367
        %v677 = vpop.f32.mrf.mxu0
        %v678 = vadd.f32 0.0, %v677
        %v679 = vpop.f32.mrf.mxu0
        %v680 = vadd.f32 0.0, %v679
        %681 = vdwg.mxu0
        %682 = vmatpush.bf16.msra.mxu0 %v541
        %683 = vmatpush.bf16.msra.mxu0 %v536
        %684 = vmatpush.bf16.msra.mxu0 %v531
        %685 = vmatpush.bf16.msra.mxu0 %v526
        %686 = vmatpush.bf16.msra.mxu0 %v521
        %687 = vmatpush.bf16.msra.mxu0 %v516
        %688 = vmatpush.bf16.msra.mxu0 %v511
        %689 = vmatpush.bf16.msra.mxu0 %v506
        %690 = vmatmul.bf16.gmra.mxu0 %v360
        %v691 = vpop.f32.mrf.mxu0
        %v692 = vadd.f32 0.0, %v691
        %v693 = vpop.f32.mrf.mxu0
        %v694 = vadd.f32 0.0, %v693
        %695 = vmatmul.bf16.gmra.mxu0 %v361
        %v696 = vpop.f32.mrf.mxu0
        %v697 = vadd.f32 0.0, %v696
        %v698 = vpop.f32.mrf.mxu0
        %v699 = vadd.f32 0.0, %v698
        %700 = vmatmul.bf16.gmra.mxu0 %v362
        %v701 = vpop.f32.mrf.mxu0
        %v702 = vadd.f32 0.0, %v701
        %v703 = vpop.f32.mrf.mxu0
        %v704 = vadd.f32 0.0, %v703
        %705 = vmatmul.bf16.gmra.mxu0 %v363
        %v706 = vpop.f32.mrf.mxu0
        %v707 = vadd.f32 0.0, %v706
        %v708 = vpop.f32.mrf.mxu0
        %v709 = vadd.f32 0.0, %v708
        %710 = vmatmul.bf16.gmra.mxu0 %v364
        %v711 = vpop.f32.mrf.mxu0
        %v712 = vadd.f32 0.0, %v711
        %v713 = vpop.f32.mrf.mxu0
        %v714 = vadd.f32 0.0, %v713
        %715 = vmatmul.bf16.gmra.mxu0 %v365
        %v716 = vpop.f32.mrf.mxu0
        %v717 = vadd.f32 0.0, %v716
        %v718 = vpop.f32.mrf.mxu0
        %v719 = vadd.f32 0.0, %v718
        %720 = vmatmul.bf16.gmra.mxu0 %v366
        %v721 = vpop.f32.mrf.mxu0
        %v722 = vadd.f32 0.0, %v721
        %v723 = vpop.f32.mrf.mxu0
        %v724 = vadd.f32 0.0, %v723
        %725 = vmatmul.bf16.gmra.mxu0 %v367
        %v726 = vpop.f32.mrf.mxu0
        %v727 = vadd.f32 0.0, %v726
        %v728 = vpop.f32.mrf.mxu0
        %v729 = vadd.f32 0.0, %v728
        %730 = vdwg.mxu0
        %731 = vmatpush.bf16.msra.mxu0 %v542
        %732 = vmatpush.bf16.msra.mxu0 %v537
        %733 = vmatpush.bf16.msra.mxu0 %v532
        %734 = vmatpush.bf16.msra.mxu0 %v527
        %735 = vmatpush.bf16.msra.mxu0 %v522
        %736 = vmatpush.bf16.msra.mxu0 %v517
        %737 = vmatpush.bf16.msra.mxu0 %v512
        %738 = vmatpush.bf16.msra.mxu0 %v507
        %739 = vmatmul.bf16.gmra.mxu0 %v360
        %v740 = vpop.f32.mrf.mxu0
        %v741 = vadd.f32 0.0, %v740
        %v742 = vpop.f32.mrf.mxu0
        %v743 = vadd.f32 0.0, %v742
        %744 = vmatmul.bf16.gmra.mxu0 %v361
        %v745 = vpop.f32.mrf.mxu0
        %v746 = vadd.f32 0.0, %v745
        %v747 = vpop.f32.mrf.mxu0
        %v748 = vadd.f32 0.0, %v747
        %749 = vmatmul.bf16.gmra.mxu0 %v362
        %v750 = vpop.f32.mrf.mxu0
        %v751 = vadd.f32 0.0, %v750
        %v752 = vpop.f32.mrf.mxu0
        %v753 = vadd.f32 0.0, %v752
        %754 = vmatmul.bf16.gmra.mxu0 %v363
        %v755 = vpop.f32.mrf.mxu0
        %v756 = vadd.f32 0.0, %v755
        %v757 = vpop.f32.mrf.mxu0
        %v758 = vadd.f32 0.0, %v757
        %759 = vmatmul.bf16.gmra.mxu0 %v364
        %v760 = vpop.f32.mrf.mxu0
        %v761 = vadd.f32 0.0, %v760
        %v762 = vpop.f32.mrf.mxu0
        %v763 = vadd.f32 0.0, %v762
        %764 = vmatmul.bf16.gmra.mxu0 %v365
        %v765 = vpop.f32.mrf.mxu0
        %v766 = vadd.f32 0.0, %v765
        %v767 = vpop.f32.mrf.mxu0
        %v768 = vadd.f32 0.0, %v767
        %769 = vmatmul.bf16.gmra.mxu0 %v366
        %v770 = vpop.f32.mrf.mxu0
        %v771 = vadd.f32 0.0, %v770
        %v772 = vpop.f32.mrf.mxu0
        %v773 = vadd.f32 0.0, %v772
        %774 = vmatmul.bf16.gmra.mxu0 %v367
        %v775 = vpop.f32.mrf.mxu0
        %v776 = vadd.f32 0.0, %v775
        %v777 = vpop.f32.mrf.mxu0
        %v778 = vadd.f32 0.0, %v777
        %779 = vdwg.mxu0
        %780 = vmatpush.bf16.msra.mxu0 %v543
        %781 = vmatpush.bf16.msra.mxu0 %v538
        %782 = vmatpush.bf16.msra.mxu0 %v533
        %783 = vmatpush.bf16.msra.mxu0 %v528
        %784 = vmatpush.bf16.msra.mxu0 %v523
        %785 = vmatpush.bf16.msra.mxu0 %v518
        %786 = vmatpush.bf16.msra.mxu0 %v513
        %787 = vmatpush.bf16.msra.mxu0 %v508
        %788 = vmatmul.bf16.gmra.mxu0 %v360
        %v789 = vpop.f32.mrf.mxu0
        %v790 = vadd.f32 0.0, %v789
        %v791 = vpop.f32.mrf.mxu0
        %v792 = vadd.f32 0.0, %v791
        %793 = vmatmul.bf16.gmra.mxu0 %v361
        %v794 = vpop.f32.mrf.mxu0
        %v795 = vadd.f32 0.0, %v794
        %v796 = vpop.f32.mrf.mxu0
        %v797 = vadd.f32 0.0, %v796
        %798 = vmatmul.bf16.gmra.mxu0 %v362
        %v799 = vpop.f32.mrf.mxu0
        %v800 = vadd.f32 0.0, %v799
        %v801 = vpop.f32.mrf.mxu0
        %v802 = vadd.f32 0.0, %v801
        %803 = vmatmul.bf16.gmra.mxu0 %v363
        %v804 = vpop.f32.mrf.mxu0
        %v805 = vadd.f32 0.0, %v804
        %v806 = vpop.f32.mrf.mxu0
        %v807 = vadd.f32 0.0, %v806
        %808 = vmatmul.bf16.gmra.mxu0 %v364
        %v809 = vpop.f32.mrf.mxu0
        %v810 = vadd.f32 0.0, %v809
        %v811 = vpop.f32.mrf.mxu0
        %v812 = vadd.f32 0.0, %v811
        %813 = vmatmul.bf16.gmra.mxu0 %v365
        %v814 = vpop.f32.mrf.mxu0
        %v815 = vadd.f32 0.0, %v814
        %v816 = vpop.f32.mrf.mxu0
        %v817 = vadd.f32 0.0, %v816
        %818 = vmatmul.bf16.gmra.mxu0 %v366
        %v819 = vpop.f32.mrf.mxu0
        %v820 = vadd.f32 0.0, %v819
        %v821 = vpop.f32.mrf.mxu0
        %v822 = vadd.f32 0.0, %v821
        %823 = vmatmul.bf16.gmra.mxu0 %v367
        %v824 = vpop.f32.mrf.mxu0
        %v825 = vadd.f32 0.0, %v824
        %v826 = vpop.f32.mrf.mxu0
        %v827 = vadd.f32 0.0, %v826
        %828 = vdwg.mxu0
        %v829 = vld [vmem:[%s261] sm:$0xff]
        %v830 = vld [vmem:[%s261 + $0x8] sm:$0xff]
        %v831 = vld [vmem:[%s261 + $0x10] sm:$0xff]
        %v832 = vld [vmem:[%s261 + $0x18] sm:$0xff]
        %v833 = vld [vmem:[%s261 + $0x20] sm:$0xff]
        %v834 = vld [vmem:[%s261 + $0x28] sm:$0xff]
        %v835 = vld [vmem:[%s261 + $0x30] sm:$0xff]
        %v836 = vld [vmem:[%s261 + $0x38] sm:$0xff]
        %v837 = vld [vmem:[%s261 + $0x40] sm:$0xff]
        %v838 = vld [vmem:[%s261 + $0x48] sm:$0xff]
        %v839 = vld [vmem:[%s261 + $0x50] sm:$0xff]
        %v840 = vld [vmem:[%s261 + $0x58] sm:$0xff]
        %v841 = vld [vmem:[%s261 + $0x60] sm:$0xff]
        %v842 = vld [vmem:[%s261 + $0x68] sm:$0xff]
        %v843 = vld [vmem:[%s261 + $0x70] sm:$0xff]
        %v844 = vld [vmem:[%s261 + $0x78] sm:$0xff]
        %846 = vset.pattern.permute.xlu0 0
        %847 = vperm.xlu0 %846, %v829
        %v848 = vpop.permute.xlu0 %847
        %851 = vset.pattern.permute.xlu0 0
        %852 = vperm.xlu0 %851, %v830
        %v853 = vpop.permute.xlu0 %852
        %856 = vset.pattern.permute.xlu0 0
        %857 = vperm.xlu0 %856, %v831
        %v858 = vpop.permute.xlu0 %857
        %861 = vset.pattern.permute.xlu0 0
        %862 = vperm.xlu0 %861, %v832
        %v863 = vpop.permute.xlu0 %862
        %866 = vset.pattern.permute.xlu0 0
        %867 = vperm.xlu0 %866, %v833
        %v868 = vpop.permute.xlu0 %867
        %871 = vset.pattern.permute.xlu0 0
        %872 = vperm.xlu0 %871, %v834
        %v873 = vpop.permute.xlu0 %872
        %876 = vset.pattern.permute.xlu0 0
        %877 = vperm.xlu0 %876, %v835
        %v878 = vpop.permute.xlu0 %877
        %881 = vset.pattern.permute.xlu0 0
        %882 = vperm.xlu0 %881, %v836
        %v883 = vpop.permute.xlu0 %882
        %886 = vset.pattern.permute.xlu0 0
        %887 = vperm.xlu0 %886, %v837
        %v888 = vpop.permute.xlu0 %887
        %891 = vset.pattern.permute.xlu0 0
        %892 = vperm.xlu0 %891, %v838
        %v893 = vpop.permute.xlu0 %892
        %896 = vset.pattern.permute.xlu0 0
        %897 = vperm.xlu0 %896, %v839
        %v898 = vpop.permute.xlu0 %897
        %901 = vset.pattern.permute.xlu0 0
        %902 = vperm.xlu0 %901, %v840
        %v903 = vpop.permute.xlu0 %902
        %906 = vset.pattern.permute.xlu0 0
        %907 = vperm.xlu0 %906, %v841
        %v908 = vpop.permute.xlu0 %907
        %911 = vset.pattern.permute.xlu0 0
        %912 = vperm.xlu0 %911, %v842
        %v913 = vpop.permute.xlu0 %912
        %916 = vset.pattern.permute.xlu0 0
        %917 = vperm.xlu0 %916, %v843
        %v918 = vpop.permute.xlu0 %917
        %921 = vset.pattern.permute.xlu0 0
        %922 = vperm.xlu0 %921, %v844
        %v923 = vpop.permute.xlu0 %922
        %v925 = vmul.f32 %v594, %v848
        %v926 = vmul.f32 %v643, %v848
        %v927 = vmul.f32 %v692, %v848
        %v928 = vmul.f32 %v741, %v848
        %v929 = vmul.f32 %v790, %v848
        %v930 = vmul.f32 %v596, %v853
        %v931 = vmul.f32 %v645, %v853
        %v932 = vmul.f32 %v694, %v853
        %v933 = vmul.f32 %v743, %v853
        %v934 = vmul.f32 %v792, %v853
        %v935 = vmul.f32 %v599, %v858
        %v936 = vmul.f32 %v648, %v858
        %v937 = vmul.f32 %v697, %v858
        %v938 = vmul.f32 %v746, %v858
        %v939 = vmul.f32 %v795, %v858
        %v940 = vmul.f32 %v601, %v863
        %v941 = vmul.f32 %v650, %v863
        %v942 = vmul.f32 %v699, %v863
        %v943 = vmul.f32 %v748, %v863
        %v944 = vmul.f32 %v797, %v863
        %v945 = vmul.f32 %v604, %v868
        %v946 = vmul.f32 %v653, %v868
        %v947 = vmul.f32 %v702, %v868
        %v948 = vmul.f32 %v751, %v868
        %v949 = vmul.f32 %v800, %v868
        %v950 = vmul.f32 %v606, %v873
        %v951 = vmul.f32 %v655, %v873
        %v952 = vmul.f32 %v704, %v873
        %v953 = vmul.f32 %v753, %v873
        %v954 = vmul.f32 %v802, %v873
        %v955 = vmul.f32 %v609, %v878
        %v956 = vmul.f32 %v658, %v878
        %v957 = vmul.f32 %v707, %v878
        %v958 = vmul.f32 %v756, %v878
        %v959 = vmul.f32 %v805, %v878
        %v960 = vmul.f32 %v611, %v883
        %v961 = vmul.f32 %v660, %v883
        %v962 = vmul.f32 %v709, %v883
        %v963 = vmul.f32 %v758, %v883
        %v964 = vmul.f32 %v807, %v883
        %v965 = vmul.f32 %v614, %v888
        %v966 = vmul.f32 %v663, %v888
        %v967 = vmul.f32 %v712, %v888
        %v968 = vmul.f32 %v761, %v888
        %v969 = vmul.f32 %v810, %v888
        %v970 = vmul.f32 %v616, %v893
        %v971 = vmul.f32 %v665, %v893
        %v972 = vmul.f32 %v714, %v893
        %v973 = vmul.f32 %v763, %v893
        %v974 = vmul.f32 %v812, %v893
        %v975 = vmul.f32 %v619, %v898
        %v976 = vmul.f32 %v668, %v898
        %v977 = vmul.f32 %v717, %v898
        %v978 = vmul.f32 %v766, %v898
        %v979 = vmul.f32 %v815, %v898
        %v980 = vmul.f32 %v621, %v903
        %v981 = vmul.f32 %v670, %v903
        %v982 = vmul.f32 %v719, %v903
        %v983 = vmul.f32 %v768, %v903
        %v984 = vmul.f32 %v817, %v903
        %v985 = vmul.f32 %v624, %v908
        %v986 = vmul.f32 %v673, %v908
        %v987 = vmul.f32 %v722, %v908
        %v988 = vmul.f32 %v771, %v908
        %v989 = vmul.f32 %v820, %v908
        %v990 = vmul.f32 %v626, %v913
        %v991 = vmul.f32 %v675, %v913
        %v992 = vmul.f32 %v724, %v913
        %v993 = vmul.f32 %v773, %v913
        %v994 = vmul.f32 %v822, %v913
        %v995 = vmul.f32 %v629, %v918
        %v996 = vmul.f32 %v678, %v918
        %v997 = vmul.f32 %v727, %v918
        %v998 = vmul.f32 %v776, %v918
        %v999 = vmul.f32 %v825, %v918
        %v1000 = vmul.f32 %v631, %v923
        %v1001 = vmul.f32 %v680, %v923
        %v1002 = vmul.f32 %v729, %v923
        %v1003 = vmul.f32 %v778, %v923
        %v1004 = vmul.f32 %v827, %v923
        %1005 = vst [vmem:[%s251] sm:$0xff] %v925
        %1006 = vst [vmem:[%s251 + $0x8] sm:$0xff] %v926
        %1007 = vst [vmem:[%s251 + $0x10] sm:$0xff] %v927
        %1008 = vst [vmem:[%s251 + $0x18] sm:$0xff] %v928
        %1009 = vst [vmem:[%s251 + $0x20] sm:$0xff] %v929
        %1010 = vst [vmem:[%s251 + $0x28] sm:$0xff] %v930
        %1011 = vst [vmem:[%s251 + $0x30] sm:$0xff] %v931
        %1012 = vst [vmem:[%s251 + $0x38] sm:$0xff] %v932
        %1013 = vst [vmem:[%s251 + $0x40] sm:$0xff] %v933
        %1014 = vst [vmem:[%s251 + $0x48] sm:$0xff] %v934
        %1015 = vst [vmem:[%s251 + $0x50] sm:$0xff] %v935
        %1016 = vst [vmem:[%s251 + $0x58] sm:$0xff] %v936
        %1017 = vst [vmem:[%s251 + $0x60] sm:$0xff] %v937
        %1018 = vst [vmem:[%s251 + $0x68] sm:$0xff] %v938
        %1019 = vst [vmem:[%s251 + $0x70] sm:$0xff] %v939
        %1020 = vst [vmem:[%s251 + $0x78] sm:$0xff] %v940
        %1021 = vst [vmem:[%s251 + $0x80] sm:$0xff] %v941
        %1022 = vst [vmem:[%s251 + $0x88] sm:$0xff] %v942
        %1023 = vst [vmem:[%s251 + $0x90] sm:$0xff] %v943
        %1024 = vst [vmem:[%s251 + $0x98] sm:$0xff] %v944
        %1025 = vst [vmem:[%s251 + $0xa0] sm:$0xff] %v945
        %1026 = vst [vmem:[%s251 + $0xa8] sm:$0xff] %v946
        %1027 = vst [vmem:[%s251 + $0xb0] sm:$0xff] %v947
        %1028 = vst [vmem:[%s251 + $0xb8] sm:$0xff] %v948
        %1029 = vst [vmem:[%s251 + $0xc0] sm:$0xff] %v949
        %1030 = vst [vmem:[%s251 + $0xc8] sm:$0xff] %v950
        %1031 = vst [vmem:[%s251 + $0xd0] sm:$0xff] %v951
        %1032 = vst [vmem:[%s251 + $0xd8] sm:$0xff] %v952
        %1033 = vst [vmem:[%s251 + $0xe0] sm:$0xff] %v953
        %1034 = vst [vmem:[%s251 + $0xe8] sm:$0xff] %v954
        %1035 = vst [vmem:[%s251 + $0xf0] sm:$0xff] %v955
        %1036 = vst [vmem:[%s251 + $0xf8] sm:$0xff] %v956
        %1037 = vst [vmem:[%s251 + $0x100] sm:$0xff] %v957
        %1038 = vst [vmem:[%s251 + $0x108] sm:$0xff] %v958
        %1039 = vst [vmem:[%s251 + $0x110] sm:$0xff] %v959
        %1040 = vst [vmem:[%s251 + $0x118] sm:$0xff] %v960
        %1041 = vst [vmem:[%s251 + $0x120] sm:$0xff] %v961
        %1042 = vst [vmem:[%s251 + $0x128] sm:$0xff] %v962
        %1043 = vst [vmem:[%s251 + $0x130] sm:$0xff] %v963
        %1044 = vst [vmem:[%s251 + $0x138] sm:$0xff] %v964
        %1045 = vst [vmem:[%s251 + $0x140] sm:$0xff] %v965
        %1046 = vst [vmem:[%s251 + $0x148] sm:$0xff] %v966
        %1047 = vst [vmem:[%s251 + $0x150] sm:$0xff] %v967
        %1048 = vst [vmem:[%s251 + $0x158] sm:$0xff] %v968
        %1049 = vst [vmem:[%s251 + $0x160] sm:$0xff] %v969
        %1050 = vst [vmem:[%s251 + $0x168] sm:$0xff] %v970
        %1051 = vst [vmem:[%s251 + $0x170] sm:$0xff] %v971
        %1052 = vst [vmem:[%s251 + $0x178] sm:$0xff] %v972
        %1053 = vst [vmem:[%s251 + $0x180] sm:$0xff] %v973
        %1054 = vst [vmem:[%s251 + $0x188] sm:$0xff] %v974
        %1055 = vst [vmem:[%s251 + $0x190] sm:$0xff] %v975
        %1056 = vst [vmem:[%s251 + $0x198] sm:$0xff] %v976
        %1057 = vst [vmem:[%s251 + $0x1a0] sm:$0xff] %v977
        %1058 = vst [vmem:[%s251 + $0x1a8] sm:$0xff] %v978
        %1059 = vst [vmem:[%s251 + $0x1b0] sm:$0xff] %v979
        %1060 = vst [vmem:[%s251 + $0x1b8] sm:$0xff] %v980
        %1061 = vst [vmem:[%s251 + $0x1c0] sm:$0xff] %v981
        %1062 = vst [vmem:[%s251 + $0x1c8] sm:$0xff] %v982
        %1063 = vst [vmem:[%s251 + $0x1d0] sm:$0xff] %v983
        %1064 = vst [vmem:[%s251 + $0x1d8] sm:$0xff] %v984
        %1065 = vst [vmem:[%s251 + $0x1e0] sm:$0xff] %v985
        %1066 = vst [vmem:[%s251 + $0x1e8] sm:$0xff] %v986
        %1067 = vst [vmem:[%s251 + $0x1f0] sm:$0xff] %v987
        %1068 = vst [vmem:[%s251 + $0x1f8] sm:$0xff] %v988
        %1069 = vst [vmem:[%s251 + $0x200] sm:$0xff] %v989
        %1070 = vst [vmem:[%s251 + $0x208] sm:$0xff] %v990
        %1071 = vst [vmem:[%s251 + $0x210] sm:$0xff] %v991
        %1072 = vst [vmem:[%s251 + $0x218] sm:$0xff] %v992
        %1073 = vst [vmem:[%s251 + $0x220] sm:$0xff] %v993
        %1074 = vst [vmem:[%s251 + $0x228] sm:$0xff] %v994
        %1075 = vst [vmem:[%s251 + $0x230] sm:$0xff] %v995
        %1076 = vst [vmem:[%s251 + $0x238] sm:$0xff] %v996
        %1077 = vst [vmem:[%s251 + $0x240] sm:$0xff] %v997
        %1078 = vst [vmem:[%s251 + $0x248] sm:$0xff] %v998
        %1079 = vst [vmem:[%s251 + $0x250] sm:$0xff] %v999
        %1080 = vst [vmem:[%s251 + $0x258] sm:$0xff] %v1000
        %1081 = vst [vmem:[%s251 + $0x260] sm:$0xff] %v1001
        %1082 = vst [vmem:[%s251 + $0x268] sm:$0xff] %v1002
        %1083 = vst [vmem:[%s251 + $0x270] sm:$0xff] %v1003
        %1084 = vst [vmem:[%s251 + $0x278] sm:$0xff] %v1004
        %1085 = vset.pattern.permute.xlu0 1
        %1086 = vperm.xlu0 %1085, %v829
        %v1087 = vpop.permute.xlu0 %1086
        %1089 = vset.pattern.permute.xlu0 1
        %1090 = vperm.xlu0 %1089, %v830
        %v1091 = vpop.permute.xlu0 %1090
        %1093 = vset.pattern.permute.xlu0 1
        %1094 = vperm.xlu0 %1093, %v831
        %v1095 = vpop.permute.xlu0 %1094
        %1097 = vset.pattern.permute.xlu0 1
        %1098 = vperm.xlu0 %1097, %v832
        %v1099 = vpop.permute.xlu0 %1098
        %1101 = vset.pattern.permute.xlu0 1
        %1102 = vperm.xlu0 %1101, %v833
        %v1103 = vpop.permute.xlu0 %1102
        %1105 = vset.pattern.permute.xlu0 1
        %1106 = vperm.xlu0 %1105, %v834
        %v1107 = vpop.permute.xlu0 %1106
        %1109 = vset.pattern.permute.xlu0 1
        %1110 = vperm.xlu0 %1109, %v835
        %v1111 = vpop.permute.xlu0 %1110
        %1113 = vset.pattern.permute.xlu0 1
        %1114 = vperm.xlu0 %1113, %v836
        %v1115 = vpop.permute.xlu0 %1114
        %1117 = vset.pattern.permute.xlu0 1
        %1118 = vperm.xlu0 %1117, %v837
        %v1119 = vpop.permute.xlu0 %1118
        %1121 = vset.pattern.permute.xlu0 1
        %1122 = vperm.xlu0 %1121, %v838
        %v1123 = vpop.permute.xlu0 %1122
        %1125 = vset.pattern.permute.xlu0 1
        %1126 = vperm.xlu0 %1125, %v839
        %v1127 = vpop.permute.xlu0 %1126
        %1129 = vset.pattern.permute.xlu0 1
        %1130 = vperm.xlu0 %1129, %v840
        %v1131 = vpop.permute.xlu0 %1130
        %1133 = vset.pattern.permute.xlu0 1
        %1134 = vperm.xlu0 %1133, %v841
        %v1135 = vpop.permute.xlu0 %1134
        %1137 = vset.pattern.permute.xlu0 1
        %1138 = vperm.xlu0 %1137, %v842
        %v1139 = vpop.permute.xlu0 %1138
        %1141 = vset.pattern.permute.xlu0 1
        %1142 = vperm.xlu0 %1141, %v843
        %v1143 = vpop.permute.xlu0 %1142
        %1145 = vset.pattern.permute.xlu0 1
        %1146 = vperm.xlu0 %1145, %v844
        %v1147 = vpop.permute.xlu0 %1146
        %v1149 = vmul.f32 %v594, %v1087
        %v1150 = vmul.f32 %v643, %v1087
        %v1151 = vmul.f32 %v692, %v1087
        %v1152 = vmul.f32 %v741, %v1087
        %v1153 = vmul.f32 %v790, %v1087
        %v1154 = vmul.f32 %v596, %v1091
        %v1155 = vmul.f32 %v645, %v1091
        %v1156 = vmul.f32 %v694, %v1091
        %v1157 = vmul.f32 %v743, %v1091
        %v1158 = vmul.f32 %v792, %v1091
        %v1159 = vmul.f32 %v599, %v1095
        %v1160 = vmul.f32 %v648, %v1095
        %v1161 = vmul.f32 %v697, %v1095
        %v1162 = vmul.f32 %v746, %v1095
        %v1163 = vmul.f32 %v795, %v1095
        %v1164 = vmul.f32 %v601, %v1099
        %v1165 = vmul.f32 %v650, %v1099
        %v1166 = vmul.f32 %v699, %v1099
        %v1167 = vmul.f32 %v748, %v1099
        %v1168 = vmul.f32 %v797, %v1099
        %v1169 = vmul.f32 %v604, %v1103
        %v1170 = vmul.f32 %v653, %v1103
        %v1171 = vmul.f32 %v702, %v1103
        %v1172 = vmul.f32 %v751, %v1103
        %v1173 = vmul.f32 %v800, %v1103
        %v1174 = vmul.f32 %v606, %v1107
        %v1175 = vmul.f32 %v655, %v1107
        %v1176 = vmul.f32 %v704, %v1107
        %v1177 = vmul.f32 %v753, %v1107
        %v1178 = vmul.f32 %v802, %v1107
        %v1179 = vmul.f32 %v609, %v1111
        %v1180 = vmul.f32 %v658, %v1111
        %v1181 = vmul.f32 %v707, %v1111
        %v1182 = vmul.f32 %v756, %v1111
        %v1183 = vmul.f32 %v805, %v1111
        %v1184 = vmul.f32 %v611, %v1115
        %v1185 = vmul.f32 %v660, %v1115
        %v1186 = vmul.f32 %v709, %v1115
        %v1187 = vmul.f32 %v758, %v1115
        %v1188 = vmul.f32 %v807, %v1115
        %v1189 = vmul.f32 %v614, %v1119
        %v1190 = vmul.f32 %v663, %v1119
        %v1191 = vmul.f32 %v712, %v1119
        %v1192 = vmul.f32 %v761, %v1119
        %v1193 = vmul.f32 %v810, %v1119
        %v1194 = vmul.f32 %v616, %v1123
        %v1195 = vmul.f32 %v665, %v1123
        %v1196 = vmul.f32 %v714, %v1123
        %v1197 = vmul.f32 %v763, %v1123
        %v1198 = vmul.f32 %v812, %v1123
        %v1199 = vmul.f32 %v619, %v1127
        %v1200 = vmul.f32 %v668, %v1127
        %v1201 = vmul.f32 %v717, %v1127
        %v1202 = vmul.f32 %v766, %v1127
        %v1203 = vmul.f32 %v815, %v1127
        %v1204 = vmul.f32 %v621, %v1131
        %v1205 = vmul.f32 %v670, %v1131
        %v1206 = vmul.f32 %v719, %v1131
        %v1207 = vmul.f32 %v768, %v1131
        %v1208 = vmul.f32 %v817, %v1131
        %v1209 = vmul.f32 %v624, %v1135
        %v1210 = vmul.f32 %v673, %v1135
        %v1211 = vmul.f32 %v722, %v1135
        %v1212 = vmul.f32 %v771, %v1135
        %v1213 = vmul.f32 %v820, %v1135
        %v1214 = vmul.f32 %v626, %v1139
        %v1215 = vmul.f32 %v675, %v1139
        %v1216 = vmul.f32 %v724, %v1139
        %v1217 = vmul.f32 %v773, %v1139
        %v1218 = vmul.f32 %v822, %v1139
        %v1219 = vmul.f32 %v629, %v1143
        %v1220 = vmul.f32 %v678, %v1143
        %v1221 = vmul.f32 %v727, %v1143
        %v1222 = vmul.f32 %v776, %v1143
        %v1223 = vmul.f32 %v825, %v1143
        %v1224 = vmul.f32 %v631, %v1147
        %v1225 = vmul.f32 %v680, %v1147
        %v1226 = vmul.f32 %v729, %v1147
        %v1227 = vmul.f32 %v778, %v1147
        %v1228 = vmul.f32 %v827, %v1147
        %s1229 = scalar_lea.vmem %s251, 640 [#allocation7]
        %1230 = vst [vmem:[%s1229] sm:$0xff] %v1149
        %1231 = vst [vmem:[%s1229 + $0x8] sm:$0xff] %v1150
        %1232 = vst [vmem:[%s1229 + $0x10] sm:$0xff] %v1151
        %1233 = vst [vmem:[%s1229 + $0x18] sm:$0xff] %v1152
        %1234 = vst [vmem:[%s1229 + $0x20] sm:$0xff] %v1153
        %1235 = vst [vmem:[%s1229 + $0x28] sm:$0xff] %v1154
        %1236 = vst [vmem:[%s1229 + $0x30] sm:$0xff] %v1155
        %1237 = vst [vmem:[%s1229 + $0x38] sm:$0xff] %v1156
        %1238 = vst [vmem:[%s1229 + $0x40] sm:$0xff] %v1157
        %1239 = vst [vmem:[%s1229 + $0x48] sm:$0xff] %v1158
        %1240 = vst [vmem:[%s1229 + $0x50] sm:$0xff] %v1159
        %1241 = vst [vmem:[%s1229 + $0x58] sm:$0xff] %v1160
        %1242 = vst [vmem:[%s1229 + $0x60] sm:$0xff] %v1161
        %1243 = vst [vmem:[%s1229 + $0x68] sm:$0xff] %v1162
        %1244 = vst [vmem:[%s1229 + $0x70] sm:$0xff] %v1163
        %1245 = vst [vmem:[%s1229 + $0x78] sm:$0xff] %v1164
        %1246 = vst [vmem:[%s1229 + $0x80] sm:$0xff] %v1165
        %1247 = vst [vmem:[%s1229 + $0x88] sm:$0xff] %v1166
        %1248 = vst [vmem:[%s1229 + $0x90] sm:$0xff] %v1167
        %1249 = vst [vmem:[%s1229 + $0x98] sm:$0xff] %v1168
        %1250 = vst [vmem:[%s1229 + $0xa0] sm:$0xff] %v1169
        %1251 = vst [vmem:[%s1229 + $0xa8] sm:$0xff] %v1170
        %1252 = vst [vmem:[%s1229 + $0xb0] sm:$0xff] %v1171
        %1253 = vst [vmem:[%s1229 + $0xb8] sm:$0xff] %v1172
        %1254 = vst [vmem:[%s1229 + $0xc0] sm:$0xff] %v1173
        %1255 = vst [vmem:[%s1229 + $0xc8] sm:$0xff] %v1174
        %1256 = vst [vmem:[%s1229 + $0xd0] sm:$0xff] %v1175
        %1257 = vst [vmem:[%s1229 + $0xd8] sm:$0xff] %v1176
        %1258 = vst [vmem:[%s1229 + $0xe0] sm:$0xff] %v1177
        %1259 = vst [vmem:[%s1229 + $0xe8] sm:$0xff] %v1178
        %1260 = vst [vmem:[%s1229 + $0xf0] sm:$0xff] %v1179
        %1261 = vst [vmem:[%s1229 + $0xf8] sm:$0xff] %v1180
        %1262 = vst [vmem:[%s1229 + $0x100] sm:$0xff] %v1181
        %1263 = vst [vmem:[%s1229 + $0x108] sm:$0xff] %v1182
        %1264 = vst [vmem:[%s1229 + $0x110] sm:$0xff] %v1183
        %1265 = vst [vmem:[%s1229 + $0x118] sm:$0xff] %v1184
        %1266 = vst [vmem:[%s1229 + $0x120] sm:$0xff] %v1185
        %1267 = vst [vmem:[%s1229 + $0x128] sm:$0xff] %v1186
        %1268 = vst [vmem:[%s1229 + $0x130] sm:$0xff] %v1187
        %1269 = vst [vmem:[%s1229 + $0x138] sm:$0xff] %v1188
        %1270 = vst [vmem:[%s1229 + $0x140] sm:$0xff] %v1189
        %1271 = vst [vmem:[%s1229 + $0x148] sm:$0xff] %v1190
        %1272 = vst [vmem:[%s1229 + $0x150] sm:$0xff] %v1191
        %1273 = vst [vmem:[%s1229 + $0x158] sm:$0xff] %v1192
        %1274 = vst [vmem:[%s1229 + $0x160] sm:$0xff] %v1193
        %1275 = vst [vmem:[%s1229 + $0x168] sm:$0xff] %v1194
        %1276 = vst [vmem:[%s1229 + $0x170] sm:$0xff] %v1195
        %1277 = vst [vmem:[%s1229 + $0x178] sm:$0xff] %v1196
        %1278 = vst [vmem:[%s1229 + $0x180] sm:$0xff] %v1197
        %1279 = vst [vmem:[%s1229 + $0x188] sm:$0xff] %v1198
        %1280 = vst [vmem:[%s1229 + $0x190] sm:$0xff] %v1199
        %1281 = vst [vmem:[%s1229 + $0x198] sm:$0xff] %v1200
        %1282 = vst [vmem:[%s1229 + $0x1a0] sm:$0xff] %v1201
        %1283 = vst [vmem:[%s1229 + $0x1a8] sm:$0xff] %v1202
        %1284 = vst [vmem:[%s1229 + $0x1b0] sm:$0xff] %v1203
        %1285 = vst [vmem:[%s1229 + $0x1b8] sm:$0xff] %v1204
        %1286 = vst [vmem:[%s1229 + $0x1c0] sm:$0xff] %v1205
        %1287 = vst [vmem:[%s1229 + $0x1c8] sm:$0xff] %v1206
        %1288 = vst [vmem:[%s1229 + $0x1d0] sm:$0xff] %v1207
        %1289 = vst [vmem:[%s1229 + $0x1d8] sm:$0xff] %v1208
        %1290 = vst [vmem:[%s1229 + $0x1e0] sm:$0xff] %v1209
        %1291 = vst [vmem:[%s1229 + $0x1e8] sm:$0xff] %v1210
        %1292 = vst [vmem:[%s1229 + $0x1f0] sm:$0xff] %v1211
        %1293 = vst [vmem:[%s1229 + $0x1f8] sm:$0xff] %v1212
        %1294 = vst [vmem:[%s1229 + $0x200] sm:$0xff] %v1213
        %1295 = vst [vmem:[%s1229 + $0x208] sm:$0xff] %v1214
        %1296 = vst [vmem:[%s1229 + $0x210] sm:$0xff] %v1215
        %1297 = vst [vmem:[%s1229 + $0x218] sm:$0xff] %v1216
        %1298 = vst [vmem:[%s1229 + $0x220] sm:$0xff] %v1217
        %1299 = vst [vmem:[%s1229 + $0x228] sm:$0xff] %v1218
        %1300 = vst [vmem:[%s1229 + $0x230] sm:$0xff] %v1219
        %1301 = vst [vmem:[%s1229 + $0x238] sm:$0xff] %v1220
        %1302 = vst [vmem:[%s1229 + $0x240] sm:$0xff] %v1221
        %1303 = vst [vmem:[%s1229 + $0x248] sm:$0xff] %v1222
        %1304 = vst [vmem:[%s1229 + $0x250] sm:$0xff] %v1223
        %1305 = vst [vmem:[%s1229 + $0x258] sm:$0xff] %v1224
        %1306 = vst [vmem:[%s1229 + $0x260] sm:$0xff] %v1225
        %1307 = vst [vmem:[%s1229 + $0x268] sm:$0xff] %v1226
        %1308 = vst [vmem:[%s1229 + $0x270] sm:$0xff] %v1227
        %1309 = vst [vmem:[%s1229 + $0x278] sm:$0xff] %v1228
        %s1310 = sand.u32 %s120, 1
        %s1311 = scalar_lea.sflag [#allocation4], %s1310
        %s1312 = sand.u32 %s120, 1
        %s1313 = smul.addr %s1312, 1280
        %s1314 = scalar_lea.vmem [#allocation7], %s1313
        // Predicated region
        $region41: #{tpu_custom_call.1} parent=31 // pred_check
          %p1315 = pneg %p130
        $region42: #{tpu_custom_call.1} parent=31 // pred_check_branch
          %1317 = sbr.rel (%p1315) target = $region44
        $region43: #{tpu_custom_call.1} parent=31 // pred_region
          #allocation9 [shape = 'u32[6]{0}', space=smem, size = 0x18, scoped, tag = 'DMA stride descriptor']
          %s1318 = smul.u32 16, %s26
          %1320 = vsyncadd %s1311, 0
          %s1321 = smul.addr %s1318, 5
          %s1322 = smul.addr %s25, 640
          %s1323 = sadd.s32 %s1321, %s1322
          %s1324 = smul.addr %s1323, 8
          %s1325 = scalar_lea.hbm %s3, %s1324
          %s1327 = sshll.u32 1, 14
          %s1328 = sxor.u32 4294967295, %s1327
          %s1331 = sshll.u32 7, 18
          %s1332 = sxor.u32 4294967295, %s1331
          %s1333 = sand.u32 0, %s1332
          %s1335 = sor.u32 %s1333, 0
          %s1336 = sshll.u32 %s1314, 4
          %s1337 = int_to_ptr.vmem [resolvable:$true] %s1336
          %s1338 = sshll.u32 %s1325, 4
          %s1339 = int_to_ptr.hbm [resolvable:$true] %s1338
          %1345 = sst [smem:[#allocation9]] 10240
          %s1346 = scalar_lea.smem [#allocation9], 1
          %1347 = sst [smem:[%s1346]] 40960
          %s1348 = scalar_lea.smem [#allocation9], 2
          %1349 = sst [smem:[%s1348]] 16
          %s1350 = scalar_lea.smem [#allocation9], 3
          %1351 = sst [smem:[%s1350]] 640
          %s1352 = scalar_lea.smem [#allocation9], 4
          %1353 = sst [smem:[%s1352]] 640
          %s1354 = scalar_lea.smem [#allocation9], 5
          %1355 = sst [smem:[%s1354]] 40
          %1357 = dma.general %s1337, 20480, %s1339, %s1311, [#allocation8], [#allocation9], %s1335, 0
        $region44: #{tpu_custom_call.1} parent=31 // pred_fallthru
          _
      $region32: #{tpu_custom_call.1} parent=5 // pred_fallthru
        _
      %p1358 = scmp.le.s32.totalorder 2, %s16
      // Predicated region
      $region45: #{tpu_custom_call.1} parent=5 // pred_check
        %p1359 = pneg %p1358
      $region46: #{tpu_custom_call.1} parent=5 // pred_check_branch
        %1361 = sbr.rel (%p1359) target = $region48
      $region47: #{tpu_custom_call.1} parent=5 // pred_region
        %s1362 = ssub.s32 %s16, 2
        // Predicated region
        $region49: #{tpu_custom_call.1} parent=47 // pred_check
          %p1363 = pneg %p136
        $region50: #{tpu_custom_call.1} parent=47 // pred_check_branch
          %1365 = sbr.rel (%p1363) target = $region52
        $region51: #{tpu_custom_call.1} parent=47 // pred_region
          %s1366 = sand.u32 %s121, 1
          %s1367 = scalar_lea.sflag [#allocation4], %s1366
          %s1368 = sand.u32 %s121, 1
          %s1369 = smul.addr %s1368, 1280
          %s1370 = scalar_lea.vmem [#allocation7], %s1369
          %1372 = dma.done %s1367, 20480
        $region52: #{tpu_custom_call.1} parent=47 // pred_fallthru
          _
      $region48: #{tpu_custom_call.1} parent=5 // pred_fallthru
        _
    $region6: #{tpu_custom_call.1} parent=1 // loop_footer
      %s20 = sadd.s32 1, %s16
    $region7: #{tpu_custom_call.1} parent=1 // loop_footer_branch
      %15 = sbr.rel target = $region3
    $region8: #{tpu_custom_call.1} parent=1 // loop_exit
      _
    %1373 = vsyncpa [#allocation3], 1
    %s1374 = scalar_lea.sflag [#allocation3], 1
    %1375 = vsyncpa %s1374, 1
    %1376 = vsyncpa [#allocation6], 1
    %1377 = vsyncpa [#allocation4], 1
    %s1378 = scalar_lea.sflag [#allocation4], 1
    %1379 = vsyncpa %s1378, 1

</llo_original>
